<compile_context>
chip_gen: v7x
topology: tpu7x:2x2x1
jax: 0.10.0
libtpu: 0.0.40
codegen_flags: <defaults>
</compile_context>

<pallas_src>
import jax
import jax.numpy as jnp
from jax.experimental import pallas as pl
from jax.experimental.pallas import tpu as pltpu


def agg_kernel(x_ref, vsum_ref, vfirst_ref, vlast_ref, const_ref,
               out_ref, acc_ref):
    # x_ref:      (bt, C, lt)  input tile (batch tile x channels x lane tile)
    # vsum_ref:   (1, C)       (v0+v1+v2)/L  -- applied to sum_l x
    # vfirst_ref: (1, C)       -v2/L         -- applied to x[:, :, 0]
    # vlast_ref:  (1, C)       -v0/L         -- applied to x[:, :, L-1]
    # const_ref:  (1, 1)       w_lin @ b_conv + b_lin
    # out_ref:    (bt, 1)      logits (same block across the L grid axis)
    # acc_ref:    (bt, 1)      VMEM accumulator
    li = pl.program_id(1)
    nl = pl.num_programs(1)

    @pl.when(li == 0)
    def _init():
        acc_ref[...] = jnp.zeros_like(acc_ref)

    x = x_ref[...]                                   # (bt, C, lt)  f32
    s = jnp.sum(x, axis=-1)                          # (bt, C)   lane reduce (XLU)
    partial = jnp.sum(s * vsum_ref[...], axis=-1,
                      keepdims=True)                 # (bt, 1)   channel reduce (VPU)

    # boundary-column corrections (padding=1 semantics of the conv)
    @pl.when(li == 0)
    def _first_col():
        acc_ref[...] += jnp.sum(x[:, :, 0] * vfirst_ref[...],
                                axis=-1, keepdims=True)

    @pl.when(li == nl - 1)
    def _last_col():
        acc_ref[...] += jnp.sum(x[:, :, -1] * vlast_ref[...],
                                axis=-1, keepdims=True)

    acc_ref[...] += partial

    @pl.when(li == nl - 1)
    def _finalize():
        out_ref[...] = (acc_ref[...] + const_ref[...]).astype(out_ref.dtype)


def _lane_tile(L):
    # Biggest 128-multiple tile that divides L (512 keeps double-buffered x
    # blocks comfortably inside v7x's smaller VMEM); otherwise keep full L.
    for lt in (512, 256, 128):
        if L > lt and L % lt == 0:
            return lt
    return L


def aggregation_forward(x, w_conv, b_conv, w_lin, b_lin):
    """x: (B, C, L) f32; w_conv: (C, C, 3); b_conv: (C,); w_lin: (1, C); b_lin: (1,)."""
    B, C, L = x.shape

    # ---- algebraic collapse of the linear network (tiny, done in the wrapper) ----
    wl = w_lin.reshape(-1)                                   # (C,)
    v = jnp.einsum('o,oik->ki', wl, w_conv)                  # (3, C): v_k over in-channels
    inv_l = 1.0 / float(L)
    vsum = ((v[0] + v[1] + v[2]) * inv_l).reshape(1, C)      # applied to sum_l x[b]
    vfirst = (-v[2] * inv_l).reshape(1, C)                   # applied to x[b, :, 0]
    vlast = (-v[0] * inv_l).reshape(1, C)                    # applied to x[b, :, L-1]
    const = (wl @ b_conv + b_lin.reshape(-1)).reshape(1, 1)  # scalar epilogue constant

    # ---- grid: parallel batch axis, L as a pipelined reduction axis ----
    bt = B if (B <= 8 or B % 8 != 0) else 8
    lt = _lane_tile(L)
    grid = (pl.cdiv(B, bt), L // lt)

    grid_spec = pltpu.PrefetchScalarGridSpec(
        num_scalar_prefetch=0,
        grid=grid,
        in_specs=[
            pl.BlockSpec((bt, C, lt), lambda bi, li: (bi, 0, li)),   # x tile
            pl.BlockSpec((1, C), lambda bi, li: (0, 0)),             # vsum
            pl.BlockSpec((1, C), lambda bi, li: (0, 0)),             # vfirst
            pl.BlockSpec((1, C), lambda bi, li: (0, 0)),             # vlast
            pl.BlockSpec((1, 1), lambda bi, li: (0, 0)),             # const
        ],
        out_specs=pl.BlockSpec((bt, 1), lambda bi, li: (bi, 0)),
        scratch_shapes=[pltpu.VMEM((bt, 1), jnp.float32)],
    )

    return pl.pallas_call(
        agg_kernel,
        out_shape=jax.ShapeDtypeStruct((B, 1), jnp.float32),
        grid_spec=grid_spec,
        compiler_params=pltpu.CompilerParams(
            dimension_semantics=("parallel", "arbitrary")),
    )(x, vsum, vfirst, vlast, const)


def reference_forward(x, w_conv, b_conv, w_lin, b_lin):
    # Independent pure-JAX reference (matches the PyTorch forward).
    y = jax.lax.conv_general_dilated(
        x, w_conv, window_strides=(1,), padding=((1, 1),),
        dimension_numbers=("NCH", "OIH", "NCH"))
    y = y + b_conv[None, :, None]
    pooled = jnp.mean(y, axis=-1)                   # (B, C)
    return pooled @ w_lin.T + b_lin[None, :]        # (B, 1)


if __name__ == "__main__":
    B, C, L = 2, 8, 16  # batch, input_size (channels), sequence_length

    key = jax.random.PRNGKey(0)
    k1, k2, k3, k4, k5 = jax.random.split(key, 5)
    w_conv = jax.random.normal(k1, (C, C, 3), jnp.float32) * 0.1
    b_conv = jax.random.normal(k2, (C,), jnp.float32) * 0.1
    w_lin = jax.random.normal(k3, (1, C), jnp.float32) * 0.1
    b_lin = jax.random.normal(k4, (1,), jnp.float32) * 0.1
    x = jax.random.normal(k5, (B, C, L), jnp.float32)

    out = jax.block_until_ready(aggregation_forward(x, w_conv, b_conv, w_lin, b_lin))
    ref = jax.block_until_ready(reference_forward(x, w_conv, b_conv, w_lin, b_lin))

    assert out.shape == (B, 1), out.shape
    assert jnp.allclose(out, ref, atol=1e-5, rtol=1e-5), (out, ref)

    print("KERNEL_OK")
</pallas_src>

<mosaic_0001>
module attributes {stable_mosaic.version = 11 : i64} {
  func.func @agg_kernel(%arg0: i32, %arg1: i32, %arg2: memref<2x8x16xf32, #tpu.memory_space<vmem>>, %arg3: memref<1x8xf32, #tpu.memory_space<vmem>>, %arg4: memref<1x8xf32, #tpu.memory_space<vmem>>, %arg5: memref<1x8xf32, #tpu.memory_space<vmem>>, %arg6: memref<1x1xf32, #tpu.memory_space<vmem>>, %arg7: memref<2x1xf32, #tpu.memory_space<vmem>>, %arg8: memref<2x1xf32, #tpu.memory_space<vmem>>) attributes {dimension_semantics = [#tpu.dimension_semantics<parallel>, #tpu.dimension_semantics<arbitrary>], iteration_bounds = array<i64: 1, 1>, scalar_prefetch = 0 : i64, scratch_operands = 1 : i64, tpu.core_type = #tpu.core_type<tc>, window_params = [{transform_indices = @transform_0, window_bounds = array<i64: 2, 8, 16>}, {pipeline_mode = #tpu.pipeline_mode<synchronous>, transform_indices = @transform_1, window_bounds = array<i64: 1, 8>}, {pipeline_mode = #tpu.pipeline_mode<synchronous>, transform_indices = @transform_2, window_bounds = array<i64: 1, 8>}, {pipeline_mode = #tpu.pipeline_mode<synchronous>, transform_indices = @transform_3, window_bounds = array<i64: 1, 8>}, {pipeline_mode = #tpu.pipeline_mode<synchronous>, transform_indices = @transform_4, window_bounds = array<i64: 1, 1>}, {transform_indices = @transform_5, window_bounds = array<i64: 2, 1>}]} {
    %c0_i32 = arith.constant 0 : i32
    %0 = arith.cmpi eq, %arg1, %c0_i32 : i32
    %1 = arith.extui %0 : i1 to i32
    %c0_i32_0 = arith.constant 0 : i32
    %2 = arith.cmpi ne, %1, %c0_i32_0 : i32
    scf.if %2 {
      %cst_16 = arith.constant 0.000000e+00 : f32
      %22 = vector.broadcast %cst_16 : f32 to vector<2x1xf32>
      %c0_17 = arith.constant 0 : index
      %c0_18 = arith.constant 0 : index
      %23 = vector.load %arg8[%c0_17, %c0_18] : memref<2x1xf32, #tpu.memory_space<vmem>>, vector<2x1xf32>
      tpu.vector_store %arg8[%c0_17, %c0_18], %22 {strides = array<i32>} : memref<2x1xf32, #tpu.memory_space<vmem>>, vector<2x1xf32>,
    } else {
    }
    %c0 = arith.constant 0 : index
    %c0_1 = arith.constant 0 : index
    %c0_2 = arith.constant 0 : index
    %3 = vector.load %arg2[%c0, %c0_1, %c0_2] : memref<2x8x16xf32, #tpu.memory_space<vmem>>, vector<2x8x16xf32>
    %cst = arith.constant dense<0.000000e+00> : vector<2x8xf32>
    %4 = vector.multi_reduction <add>, %3, %cst [2] : vector<2x8x16xf32> to vector<2x8xf32>
    %c0_3 = arith.constant 0 : index
    %c0_4 = arith.constant 0 : index
    %5 = vector.load %arg3[%c0_3, %c0_4] : memref<1x8xf32, #tpu.memory_space<vmem>>, vector<1x8xf32>
    %6 = vector.broadcast %5 : vector<1x8xf32> to vector<2x8xf32>
    %7 = arith.mulf %4, %6 : vector<2x8xf32>
    %cst_5 = arith.constant dense<0.000000e+00> : vector<2xf32>
    %8 = vector.multi_reduction <add>, %7, %cst_5 [1] : vector<2x8xf32> to vector<2xf32>
    %9 = vector.shape_cast %8 : vector<2xf32> to vector<2x1xf32>
    %c0_i32_6 = arith.constant 0 : i32
    %10 = arith.cmpi eq, %arg1, %c0_i32_6 : i32
    %11 = arith.extui %10 : i1 to i32
    %c0_i32_7 = arith.constant 0 : i32
    %12 = arith.cmpi ne, %11, %c0_i32_7 : i32
    scf.if %12 {
      %c0_16 = arith.constant 0 : index
      %c0_17 = arith.constant 0 : index
      %22 = vector.load %arg8[%c0_16, %c0_17] : memref<2x1xf32, #tpu.memory_space<vmem>>, vector<2x1xf32>
      %23 = vector.extract_strided_slice %3 {offsets = [0, 0, 0], sizes = [2, 8, 1], strides = [1, 1, 1]} : vector<2x8x16xf32> to vector<2x8x1xf32>
      %24 = vector.shape_cast %23 : vector<2x8x1xf32> to vector<2x8xf32>
      %c0_18 = arith.constant 0 : index
      %c0_19 = arith.constant 0 : index
      %25 = vector.load %arg4[%c0_18, %c0_19] : memref<1x8xf32, #tpu.memory_space<vmem>>, vector<1x8xf32>
      %26 = vector.broadcast %25 : vector<1x8xf32> to vector<2x8xf32>
      %27 = arith.mulf %24, %26 : vector<2x8xf32>
      %cst_20 = arith.constant dense<0.000000e+00> : vector<2xf32>
      %28 = vector.multi_reduction <add>, %27, %cst_20 [1] : vector<2x8xf32> to vector<2xf32>
      %29 = vector.shape_cast %28 : vector<2xf32> to vector<2x1xf32>
      %30 = arith.addf %22, %29 : vector<2x1xf32>
      %c0_21 = arith.constant 0 : index
      %c0_22 = arith.constant 0 : index
      %31 = vector.load %arg8[%c0_21, %c0_22] : memref<2x1xf32, #tpu.memory_space<vmem>>, vector<2x1xf32>
      tpu.vector_store %arg8[%c0_21, %c0_22], %30 {strides = array<i32>} : memref<2x1xf32, #tpu.memory_space<vmem>>, vector<2x1xf32>,
    } else {
    }
    %c0_i32_8 = arith.constant 0 : i32
    %13 = arith.cmpi eq, %arg1, %c0_i32_8 : i32
    %14 = arith.extui %13 : i1 to i32
    %c0_i32_9 = arith.constant 0 : i32
    %15 = arith.cmpi ne, %14, %c0_i32_9 : i32
    scf.if %15 {
      %c0_16 = arith.constant 0 : index
      %c0_17 = arith.constant 0 : index
      %22 = vector.load %arg8[%c0_16, %c0_17] : memref<2x1xf32, #tpu.memory_space<vmem>>, vector<2x1xf32>
      %23 = vector.extract_strided_slice %3 {offsets = [0, 0, 15], sizes = [2, 8, 1], strides = [1, 1, 1]} : vector<2x8x16xf32> to vector<2x8x1xf32>
      %24 = vector.shape_cast %23 : vector<2x8x1xf32> to vector<2x8xf32>
      %c0_18 = arith.constant 0 : index
      %c0_19 = arith.constant 0 : index
      %25 = vector.load %arg5[%c0_18, %c0_19] : memref<1x8xf32, #tpu.memory_space<vmem>>, vector<1x8xf32>
      %26 = vector.broadcast %25 : vector<1x8xf32> to vector<2x8xf32>
      %27 = arith.mulf %24, %26 : vector<2x8xf32>
      %cst_20 = arith.constant dense<0.000000e+00> : vector<2xf32>
      %28 = vector.multi_reduction <add>, %27, %cst_20 [1] : vector<2x8xf32> to vector<2xf32>
      %29 = vector.shape_cast %28 : vector<2xf32> to vector<2x1xf32>
      %30 = arith.addf %22, %29 : vector<2x1xf32>
      %c0_21 = arith.constant 0 : index
      %c0_22 = arith.constant 0 : index
      %31 = vector.load %arg8[%c0_21, %c0_22] : memref<2x1xf32, #tpu.memory_space<vmem>>, vector<2x1xf32>
      tpu.vector_store %arg8[%c0_21, %c0_22], %30 {strides = array<i32>} : memref<2x1xf32, #tpu.memory_space<vmem>>, vector<2x1xf32>,
    } else {
    }
    %c0_10 = arith.constant 0 : index
    %c0_11 = arith.constant 0 : index
    %16 = vector.load %arg8[%c0_10, %c0_11] : memref<2x1xf32, #tpu.memory_space<vmem>>, vector<2x1xf32>
    %17 = arith.addf %16, %9 : vector<2x1xf32>
    %c0_12 = arith.constant 0 : index
    %c0_13 = arith.constant 0 : index
    %18 = vector.load %arg8[%c0_12, %c0_13] : memref<2x1xf32, #tpu.memory_space<vmem>>, vector<2x1xf32>
    tpu.vector_store %arg8[%c0_12, %c0_13], %17 {strides = array<i32>} : memref<2x1xf32, #tpu.memory_space<vmem>>, vector<2x1xf32>,
    %c0_i32_14 = arith.constant 0 : i32
    %19 = arith.cmpi eq, %arg1, %c0_i32_14 : i32
    %20 = arith.extui %19 : i1 to i32
    %c0_i32_15 = arith.constant 0 : i32
    %21 = arith.cmpi ne, %20, %c0_i32_15 : i32
    scf.if %21 {
      %c0_16 = arith.constant 0 : index
      %c0_17 = arith.constant 0 : index
      %22 = vector.load %arg8[%c0_16, %c0_17] : memref<2x1xf32, #tpu.memory_space<vmem>>, vector<2x1xf32>
      %c0_18 = arith.constant 0 : index
      %c0_19 = arith.constant 0 : index
      %23 = vector.load %arg6[%c0_18, %c0_19] : memref<1x1xf32, #tpu.memory_space<vmem>>, vector<1x1xf32>
      %24 = vector.broadcast %23 : vector<1x1xf32> to vector<2x1xf32>
      %25 = arith.addf %22, %24 : vector<2x1xf32>
      %c0_20 = arith.constant 0 : index
      %c0_21 = arith.constant 0 : index
      %26 = vector.load %arg7[%c0_20, %c0_21] : memref<2x1xf32, #tpu.memory_space<vmem>>, vector<2x1xf32>
      tpu.vector_store %arg7[%c0_20, %c0_21], %25 {strides = array<i32>} : memref<2x1xf32, #tpu.memory_space<vmem>>, vector<2x1xf32>,
    } else {
    }
    return
  }
  func.func @transform_0(%arg0: i32, %arg1: i32) -> (i32, i32, i32) {
    %c0_i32 = arith.constant 0 : i32
    %c0_i32_0 = arith.constant 0 : i32
    return %arg0, %c0_i32, %arg1 : i32, i32, i32
  }
  func.func @transform_1(%arg0: i32, %arg1: i32) -> (i32, i32) {
    %c0_i32 = arith.constant 0 : i32
    %c0_i32_0 = arith.constant 0 : i32
    %c0_i32_1 = arith.constant 0 : i32
    return %c0_i32, %c0_i32_0 : i32, i32
  }
  func.func @transform_2(%arg0: i32, %arg1: i32) -> (i32, i32) {
    %c0_i32 = arith.constant 0 : i32
    %c0_i32_0 = arith.constant 0 : i32
    %c0_i32_1 = arith.constant 0 : i32
    return %c0_i32, %c0_i32_0 : i32, i32
  }
  func.func @transform_3(%arg0: i32, %arg1: i32) -> (i32, i32) {
    %c0_i32 = arith.constant 0 : i32
    %c0_i32_0 = arith.constant 0 : i32
    %c0_i32_1 = arith.constant 0 : i32
    return %c0_i32, %c0_i32_0 : i32, i32
  }
  func.func @transform_4(%arg0: i32, %arg1: i32) -> (i32, i32) {
    %c0_i32 = arith.constant 0 : i32
    %c0_i32_0 = arith.constant 0 : i32
    %c0_i32_1 = arith.constant 0 : i32
    return %c0_i32, %c0_i32_0 : i32, i32
  }
  func.func @transform_5(%arg0: i32, %arg1: i32) -> (i32, i32) {
    %c0_i32 = arith.constant 0 : i32
    %c0_i32_0 = arith.constant 0 : i32
    return %arg0, %c0_i32 : i32, i32
  }
}

</mosaic_0001>

<llo_original>
// kernel: tpu_custom_call.1
$region0: #{tpu_custom_call.1}
  #allocation0 [shape = 'u32[]', space=smem, size = 0x4, offset = 0x4, fixed_abs, tag = 'smem constant byte address 0x4 - core index']
  #allocation1 [shape = 'u32[144,128]{1,0:T(1,128)}', space=vmem, size = 0x12000, scoped, tag = 'internal scratch']
  #allocation2 [shape = 'f32[2,1]{1,0:T(2,128)}', space=vmem, size = 0x400, scoped, tag = 'scratch operand']
  #allocation3 [shape = 'f32[1,1]{1,0:T(1,128)S(1)}', space=vmem, size = 0x200, scoped, tag = 'scoped memory for tpu_custom_call.1']
  %s0 = inlined_call_operand.hbm [shape: f32[2,8,16], index: 0, kind: input, shape index: {}]
  %s1 = inlined_call_operand.vmem [shape: f32[1,8], index: 1, kind: input, shape index: {}]
  %s2 = inlined_call_operand.vmem [shape: f32[1,8], index: 2, kind: input, shape index: {}]
  %s3 = inlined_call_operand.vmem [shape: f32[1,8], index: 3, kind: input, shape index: {}]
  %s4 = inlined_call_operand.<no memory space> [shape: f32[1,1], index: 4, kind: input, shape index: {}]
  %s5 = inlined_call_operand.vmem [shape: f32[2,1], index: 5, kind: output, shape index: {}]
  %s6 = sld [smem:[#allocation0]]
  $region46: #{tpu_custom_call.1} parent=0
    _
  %s8 = ssub.s32 1, %s6
  %s9 = scalar_select 0, %s8, %s6
  %v10 = vstv %s4
  %11 = vst [vmem:[#allocation3] sm:$0x1] %v10
  $region1: #{tpu_custom_call.1} parent=0
    #allocation4 [shape = 'u8[8192]{0}', space=vmem, size = 0x2000, scoped, tag = 'input window, operand 0, single buffered']
    #allocation5 [shape = 's32[1]{0}', space=sflag, size = 0x4, scoped, tag = 'scoped memory for tpu_custom_call.1']
    %12 = vsyncpa [#allocation5], 0
    // Predicated region
    $region2: #{tpu_custom_call.1} parent=1 // pred_check
      _
    $region3: #{tpu_custom_call.1} parent=1 // pred_check_branch
      %14 = sbr.rel (0) target = $region5
    $region4: #{tpu_custom_call.1} parent=1 // pred_region
      %s16 = ssub.s32 256, 256
      %17 = vsyncadd [#allocation5], %s16
      %s18 = sshll.u32 [#allocation4], 4
      %s19 = int_to_ptr.vmem [resolvable:$true] %s18
      %24 = dma.hbm_to_vmem [thread:$0]  %s0, 256, %s19, [#allocation5], 128, 128, 8
    $region5: #{tpu_custom_call.1} parent=1 // pred_fallthru
      _
    // Predicated region
    $region6: #{tpu_custom_call.1} parent=1 // pred_check
      _
    $region7: #{tpu_custom_call.1} parent=1 // pred_check_branch
      %26 = sbr.rel (0) target = $region9
    $region8: #{tpu_custom_call.1} parent=1 // pred_region
      _
    $region9: #{tpu_custom_call.1} parent=1 // pred_fallthru
      _
    // Predicated region
    $region10: #{tpu_custom_call.1} parent=1 // pred_check
      _
    $region11: #{tpu_custom_call.1} parent=1 // pred_check_branch
      %28 = sbr.rel (0) target = $region13
    $region12: #{tpu_custom_call.1} parent=1 // pred_region
      _
    $region13: #{tpu_custom_call.1} parent=1 // pred_fallthru
      _
    // Predicated region
    $region14: #{tpu_custom_call.1} parent=1 // pred_check
      _
    $region15: #{tpu_custom_call.1} parent=1 // pred_check_branch
      %30 = sbr.rel (0) target = $region17
    $region16: #{tpu_custom_call.1} parent=1 // pred_region
      _
    $region17: #{tpu_custom_call.1} parent=1 // pred_fallthru
      _
    // Predicated region
    $region18: #{tpu_custom_call.1} parent=1 // pred_check
      _
    $region19: #{tpu_custom_call.1} parent=1 // pred_check_branch
      %32 = sbr.rel (0) target = $region21
    $region20: #{tpu_custom_call.1} parent=1 // pred_region
      _
    $region21: #{tpu_custom_call.1} parent=1 // pred_fallthru
      _
    // Predicated region
    $region22: #{tpu_custom_call.1} parent=1 // pred_check
      _
    $region23: #{tpu_custom_call.1} parent=1 // pred_check_branch
      %34 = sbr.rel (0) target = $region25
    $region24: #{tpu_custom_call.1} parent=1 // pred_region
      %35 = dma.done [#allocation5], 256
    $region25: #{tpu_custom_call.1} parent=1 // pred_fallthru
      _
    %p36 = scmp.eq.s32.totalorder 0, 0
    // Predicated region
    $region26: #{tpu_custom_call.1} parent=1 // pred_check
      %p37 = pneg %p36
    $region27: #{tpu_custom_call.1} parent=1 // pred_check_branch
      %39 = sbr.rel (%p37) target = $region29
    $region28: #{tpu_custom_call.1} parent=1 // pred_region
      %vm40 = vcmask 1024
      %41 = vst.msk [vmem:[#allocation2] sm:$0x3] %vm40, 0.0
    $region29: #{tpu_custom_call.1} parent=1 // pred_fallthru
      _
    %v42 = vld [vmem:[#allocation4] sm:$0xff]
    %v43 = vld [vmem:[#allocation4 + $0x8] sm:$0xff]
    %vm44 = vcmask 130048
    %v45 = vsel %vm44, %v42, 0.0
    %46 = vadd.xlane.f32.xlu0 %v45
    %v47 = vpop.xlane.xlu0 %46
    %v48 = vsel %vm44, %v43, 0.0
    %49 = vadd.xlane.f32.xlu0 %v48
    %v50 = vpop.xlane.xlu0 %49
    %v51 = vld [vmem:[%s1] sm:$0x1]
    %v53 = vlaneseq
    %v54 = vshrl.u32 %v53, 7
    %v55 = vsub.s32 0, %v54
    %v56 = vrot.slane %v51, %v55
    %58 = vbcast.lane.b32.xlu0 %v56, 256
    %v59 = vpop.permute.xlu0 %58
    %v61 = vmul.f32 %v47, %v59
    %v62 = vmul.f32 %v50, %v59
    %65 = vset.pattern.permute.xlu0 0
    %66 = vperm.xlu0 %65, %v61
    %v67 = vpop.permute.xlu0 %66
    %68 = vset.pattern.permute.xlu0 0
    %69 = vperm.xlu0 %68, %v62
    %v70 = vpop.permute.xlu0 %69
    %v71 = vlaneseq
    %v72 = vand.u32 %v71, 127
    %v73 = vlaneseq
    %v74 = vshrl.u32 %v73, 7
    %v75 = vsub.s32 %v72, %v74
    %v76 = vrot.slane %v67, %v75
    %v77 = vlaneseq
    %v78 = vshrl.u32 %v77, 7
    %v79 = vsub.s32 %v72, %v78
    %v80 = vrot.slane %v70, %v79
    %vm81 = vcmask 1041409
    %v82 = vsel %vm81, %v80, %v76
    %vm84 = vcmask 58368
    %v85 = vsel %vm84, %v82, 0.0
    %86 = vadd.xlane.f32.xlu0 %v85
    %v87 = vpop.xlane.xlu0 %86
    // Predicated region
    $region30: #{tpu_custom_call.1} parent=1 // pred_check
      %p88 = pneg %p36
    $region31: #{tpu_custom_call.1} parent=1 // pred_check_branch
      %90 = sbr.rel (%p88) target = $region33
    $region32: #{tpu_custom_call.1} parent=1 // pred_region
      %v91 = vld [vmem:[#allocation2] sm:$0x3]
      %v92 = vld [vmem:[%s2] sm:$0x1]
      %v94 = vlaneseq
      %v95 = vshrl.u32 %v94, 7
      %v96 = vsub.s32 0, %v95
      %v97 = vrot.slane %v92, %v96
      %99 = vbcast.lane.b32.xlu0 %v97, 256
      %v100 = vpop.permute.xlu0 %99
      %v102 = vmul.f32 %v42, %v100
      %v103 = vmul.f32 %v43, %v100
      %106 = vset.pattern.permute.xlu0 0
      %107 = vperm.xlu0 %106, %v102
      %v108 = vpop.permute.xlu0 %107
      %109 = vset.pattern.permute.xlu0 0
      %110 = vperm.xlu0 %109, %v103
      %v111 = vpop.permute.xlu0 %110
      %v112 = vlaneseq
      %v113 = vshrl.u32 %v112, 7
      %v114 = vsub.s32 %v72, %v113
      %v115 = vrot.slane %v108, %v114
      %v116 = vlaneseq
      %v117 = vshrl.u32 %v116, 7
      %v118 = vsub.s32 %v72, %v117
      %v119 = vrot.slane %v111, %v118
      %v120 = vsel %vm81, %v119, %v115
      %v122 = vsel %vm84, %v120, 0.0
      %123 = vadd.xlane.f32.xlu0 %v122
      %v124 = vpop.xlane.xlu0 %123
      %v125 = vadd.f32 %v91, %v124
      %vm126 = vcmask 1024
      %127 = vst.msk [vmem:[#allocation2] sm:$0x3] %vm126, %v125
      %v128 = vld [vmem:[#allocation2] sm:$0x3]
      %v129 = vld [vmem:[%s3] sm:$0x1]
      %v131 = vlaneseq
      %v132 = vshrl.u32 %v131, 7
      %v133 = vsub.s32 0, %v132
      %v134 = vrot.slane %v129, %v133
      %136 = vbcast.lane.b32.xlu0 %v134, 256
      %v137 = vpop.permute.xlu0 %136
      %v139 = vmul.f32 %v42, %v137
      %v140 = vmul.f32 %v43, %v137
      %143 = vset.pattern.permute.xlu0 15
      %144 = vperm.xlu0 %143, %v139
      %v145 = vpop.permute.xlu0 %144
      %146 = vset.pattern.permute.xlu0 15
      %147 = vperm.xlu0 %146, %v140
      %v148 = vpop.permute.xlu0 %147
      %v149 = vlaneseq
      %v150 = vshrl.u32 %v149, 7
      %v151 = vsub.s32 %v72, %v150
      %v152 = vrot.slane %v145, %v151
      %v153 = vlaneseq
      %v154 = vshrl.u32 %v153, 7
      %v155 = vsub.s32 %v72, %v154
      %v156 = vrot.slane %v148, %v155
      %v157 = vsel %vm81, %v156, %v152
      %v159 = vsel %vm84, %v157, 0.0
      %160 = vadd.xlane.f32.xlu0 %v159
      %v161 = vpop.xlane.xlu0 %160
      %v162 = vadd.f32 %v128, %v161
      %163 = vst.msk [vmem:[#allocation2] sm:$0x3] %vm126, %v162
    $region33: #{tpu_custom_call.1} parent=1 // pred_fallthru
      _
    %v164 = vld [vmem:[#allocation2] sm:$0x3]
    %v165 = vadd.f32 %v164, %v87
    %vm166 = vcmask 1024
    %167 = vst.msk [vmem:[#allocation2] sm:$0x3] %vm166, %v165
    // Predicated region
    $region34: #{tpu_custom_call.1} parent=1 // pred_check
      %p168 = pneg %p36
    $region35: #{tpu_custom_call.1} parent=1 // pred_check_branch
      %170 = sbr.rel (%p168) target = $region37
    $region36: #{tpu_custom_call.1} parent=1 // pred_region
      %v171 = vld [vmem:[#allocation2] sm:$0x3]
      %v172 = vld [vmem:[#allocation3] sm:$0x1]
      %v174 = vlaneseq
      %v175 = vshrl.u32 %v174, 7
      %v176 = vsub.s32 0, %v175
      %v177 = vrot.slane %v172, %v176
      %v179 = vadd.f32 %v171, %v177
      %180 = vst.msk [vmem:[%s5] sm:$0x3] %vm166, %v179
    $region37: #{tpu_custom_call.1} parent=1 // pred_fallthru
      _
    // Predicated region
    $region38: #{tpu_custom_call.1} parent=1 // pred_check
      _
    $region39: #{tpu_custom_call.1} parent=1 // pred_check_branch
      %182 = sbr.rel (0) target = $region41
    $region40: #{tpu_custom_call.1} parent=1 // pred_region
      _
    $region41: #{tpu_custom_call.1} parent=1 // pred_fallthru
      _
    // Predicated region
    $region42: #{tpu_custom_call.1} parent=1 // pred_check
      _
    $region43: #{tpu_custom_call.1} parent=1 // pred_check_branch
      %184 = sbr.rel (0) target = $region45
    $region44: #{tpu_custom_call.1} parent=1 // pred_region
      _
    $region45: #{tpu_custom_call.1} parent=1 // pred_fallthru
      _
    %185 = vsyncpa [#allocation5], 1

</llo_original>
